<compile_context>
chip_gen: v5e
topology: v5e:2x2
jax: 0.10.0
libtpu: 0.0.40
codegen_flags: <defaults>
</compile_context>

<pallas_src>
from functools import partial

import jax
import jax.numpy as jnp
from jax.experimental import pallas as pl
from jax.experimental.pallas import tpu as pltpu

F_NODE = 22     # node feature size (hard-coded via 3*22 in EdgeConv's mlp)
F_EDGE = 22     # edge_attr feature size
HIDDEN = 32     # hidden_dim
OUT = 1         # out_channels of each head
N_HEADS = 3     # mu, sigma, alpha (fused)

# Row offsets inside the packed head-weight slab [64, 3] (all starts 8-aligned
# or 0 so in-kernel sublane slices need no relayout).
_WX_OFF = 0          # rows  0:22  -> x-part of the fused head weight
_WH_OFF = 24         # rows 24:56  -> agg-part of the fused head weight
_BH_OFF = 56         # row  56     -> fused head bias
_HEAD_ROWS = 64


def _softplus(z):
    # matches torch.nn.functional.softplus(beta=1, threshold=20)
    return jnp.where(z > 20.0, z, jnp.log1p(jnp.exp(jnp.minimum(z, 20.0))))


def gnn_actor_kernel(
    ep_ref,                      # [1, 2E] int32 : edge_index[0] | edge_index[1] (lane-major)
    x_ref, ea_ref,               # [N, 22] f32, [E, 22] f32 (this graph)
    w1s_ref,                     # [3, 22, 32] f32 : Linear(3*22->32) split by input block
    b12_ref,                     # [2, 32]  f32 : b1 | b2
    w2_ref,                      # [32, 32] f32 : Linear(32->32)
    whd_ref,                     # [64, 3]  f32 : packed fused heads (wx | wh | bh)
    out_ref,                     # [N, 3]   f32 : mu | sigma | alpha
):
    x = x_ref[...]               # [N, 22]
    ea = ea_ref[...]             # [E, 22]
    ep = ep_ref[...]             # [1, 2E]
    n = x.shape[0]
    e = ea.shape[0]

    # Transposed one-hot for BOTH endpoints in a single [N, 2E] matrix.  The
    # [1, 2E] endpoint row broadcasts along sublanes (the cheap direction).
    row = jax.lax.broadcasted_iota(jnp.int32, (n, 2 * e), 0)
    g = (ep == row).astype(jnp.float32)                              # [N, 2E]

    # ONE fused gather for x_i and x_j: g^T @ x  (single MXU push).
    xij = jax.lax.dot_general(g, x, (((0,), (0,)), ((), ())),
                              preferred_element_type=jnp.float32)    # [2E, 22]
    x_i = xij[:e]                # rows 0:E   (E is a multiple of 8 -> aligned slice)
    x_j = xij[e:]                # rows E:2E

    # EdgeConv message MLP: Linear(3*22 -> 32) on cat([x_i, x_j, edge_attr])
    # expressed with the weight split into three row-blocks (exact equivalence),
    # then ReLU, then Linear(32 -> 32).
    b12 = b12_ref[...]                                               # [2, 32]
    h = (jnp.dot(x_i, w1s_ref[0], preferred_element_type=jnp.float32)
         + jnp.dot(x_j, w1s_ref[1], preferred_element_type=jnp.float32)
         + jnp.dot(ea, w1s_ref[2], preferred_element_type=jnp.float32)
         + b12[0:1])                                                 # [E, 32]
    h = jnp.maximum(h, 0.0)                                          # ReLU
    msg = jnp.dot(h, w2_ref[...], preferred_element_type=jnp.float32) + b12[1:2]

    # aggr='add' at the source node: the first E columns of g are already the
    # transposed scatter matrix, so it feeds the MXU with no transpose.
    agg = jnp.dot(g[:, :e], msg, preferred_element_type=jnp.float32)  # [N, 32]

    # Fused heads on cat([x, agg], dim=1): one matmul pair, one softplus, one store.
    whd = whd_ref[...]                                               # [64, 3]
    z = (jnp.dot(x, whd[_WX_OFF:_WX_OFF + F_NODE], preferred_element_type=jnp.float32)
         + jnp.dot(agg, whd[_WH_OFF:_WH_OFF + HIDDEN], preferred_element_type=jnp.float32)
         + whd[_BH_OFF:_BH_OFF + 1])                                 # [N, 3]
    out_ref[...] = _softplus(z)


def prepare_params(params):
    """One-time parameter surgery, hoisted out of the per-call hot path."""
    w1 = params["w1"]                                                # [66, 32]
    w1s = jnp.stack(
        [w1[:F_NODE], w1[F_NODE:2 * F_NODE], w1[2 * F_NODE:]], axis=0)   # [3, 22, 32]
    b12 = jnp.concatenate([params["b1"], params["b2"]], axis=0)          # [2, 32]

    wx = jnp.concatenate(
        [params["wmu"][:F_NODE], params["wsg"][:F_NODE], params["wal"][:F_NODE]], axis=1)
    wh = jnp.concatenate(
        [params["wmu"][F_NODE:], params["wsg"][F_NODE:], params["wal"][F_NODE:]], axis=1)
    bh = jnp.concatenate([params["bmu"], params["bsg"], params["bal"]], axis=1)

    whd = jnp.zeros((_HEAD_ROWS, N_HEADS), jnp.float32)
    whd = whd.at[_WX_OFF:_WX_OFF + F_NODE].set(wx)
    whd = whd.at[_WH_OFF:_WH_OFF + HIDDEN].set(wh)
    whd = whd.at[_BH_OFF:_BH_OFF + 1].set(bh)

    return dict(w1s=w1s, b12=b12, w2=params["w2"], whd=whd)


@jax.jit
def gnn_actor_forward_batched(prep, x, edge_index, edge_attr):
    """x: [B, N, 22], edge_index: [B, 2, E] int, edge_attr: [B, E, 22]."""
    b, n, _ = x.shape
    e = edge_attr.shape[1]

    # [B, 2, E] -> [B, 1, 2E]  (src row followed by dst row; free layout-wise).
    ep = edge_index.astype(jnp.int32).reshape(b, 1, 2 * e)

    out = pl.pallas_call(
        gnn_actor_kernel,
        out_shape=jax.ShapeDtypeStruct((b, n, N_HEADS), jnp.float32),
        grid=(b,),
        in_specs=[
            pl.BlockSpec((None, 1, 2 * e), lambda i: (i, 0, 0)),         # endpoints (per graph)
            pl.BlockSpec((None, n, F_NODE), lambda i: (i, 0, 0)),        # x          (per graph)
            pl.BlockSpec((None, e, F_EDGE), lambda i: (i, 0, 0)),        # edge_attr  (per graph)
            pl.BlockSpec((3, F_NODE, HIDDEN), lambda i: (0, 0, 0)),      # W1 stack   (resident)
            pl.BlockSpec((2, HIDDEN), lambda i: (0, 0)),                 # b1 | b2    (resident)
            pl.BlockSpec((HIDDEN, HIDDEN), lambda i: (0, 0)),            # W2         (resident)
            pl.BlockSpec((_HEAD_ROWS, N_HEADS), lambda i: (0, 0)),       # fused heads (resident)
        ],
        out_specs=pl.BlockSpec((None, n, N_HEADS), lambda i: (i, 0, 0)),
        compiler_params=pltpu.CompilerParams(
            dimension_semantics=("parallel",)),
    )(ep, x, edge_attr, prep["w1s"], prep["b12"], prep["w2"], prep["whd"])

    mu = out[..., 0:OUT]
    sigma = out[..., OUT:2 * OUT]
    alpha = out[..., 2 * OUT:3 * OUT]
    return (mu, sigma), alpha


def gnn_actor_forward(prep, x, edge_index, edge_attr):
    """Single-graph entry matching the PyTorch module's forward signature."""
    (mu, sigma), alpha = gnn_actor_forward_batched(
        prep, x[None], edge_index[None], edge_attr[None])
    return (mu[0], sigma[0]), alpha[0]


def init_params(key):
    # Deterministic synthetic init mimicking torch.nn.Linear (U(-1/sqrt(fan_in), ..)).
    ks = jax.random.split(key, 5)

    def lin(k, fan_in, fan_out):
        bound = 1.0 / float(fan_in) ** 0.5
        kw, kb = jax.random.split(k)
        w = jax.random.uniform(kw, (fan_in, fan_out), jnp.float32, -bound, bound)
        b = jax.random.uniform(kb, (1, fan_out), jnp.float32, -bound, bound)
        return w, b

    w1, b1 = lin(ks[0], 3 * F_NODE, HIDDEN)        # EdgeConv mlp[0]
    w2, b2 = lin(ks[1], HIDDEN, HIDDEN)            # EdgeConv mlp[2]
    wmu, bmu = lin(ks[2], F_NODE + HIDDEN, OUT)    # h_to_mu
    wsg, bsg = lin(ks[3], F_NODE + HIDDEN, OUT)    # h_to_sigma
    wal, bal = lin(ks[4], F_NODE + HIDDEN, OUT)    # h_to_concentration
    return dict(w1=w1, b1=b1, w2=w2, b2=b2,
                wmu=wmu, bmu=bmu, wsg=wsg, bsg=bsg, wal=wal, bal=bal)


def reference_forward(params, x, edge_index, edge_attr):
    # Pure-JAX mirror of the PyTorch forward (single graph, for correctness).
    x_i = x[edge_index[0]]
    x_j = x[edge_index[1]]
    tmp = jnp.concatenate([x_i, x_j, edge_attr], axis=1)
    h = jnp.maximum(tmp @ params["w1"] + params["b1"], 0.0)
    msg = h @ params["w2"] + params["b2"]
    agg = jnp.zeros((x.shape[0], HIDDEN), jnp.float32).at[edge_index[0]].add(msg)
    xpp = jnp.concatenate([x, agg], axis=1)
    mu = _softplus(xpp @ params["wmu"] + params["bmu"])
    sigma = _softplus(xpp @ params["wsg"] + params["bsg"])
    alpha = _softplus(xpp @ params["wal"] + params["bal"])
    return (mu, sigma), alpha


if __name__ == "__main__":
    key = jax.random.PRNGKey(0)
    k_param, k_x, k_ei, k_ea = jax.random.split(key, 4)

    B = 4       # graphs per pallas_call (batched over the parallel grid axis)
    N = 8       # nodes per graph
    E = 24      # edges per graph (keep a multiple of 8 for aligned sublane slices)

    params = init_params(k_param)
    prep = prepare_params(params)

    xb = jax.random.normal(k_x, (B, N, F_NODE), jnp.float32)
    eib = jax.random.randint(k_ei, (B, 2, E), 0, N, dtype=jnp.int32)
    eab = jax.random.normal(k_ea, (B, E, F_EDGE), jnp.float32)

    # Batched kernel call.
    (mu_b, sg_b), al_b = gnn_actor_forward_batched(prep, xb, eib, eab)
    jax.block_until_ready((mu_b, sg_b, al_b))
    assert mu_b.shape == (B, N, OUT) and sg_b.shape == (B, N, OUT) and al_b.shape == (B, N, OUT)

    # Per-graph correctness against the pure-JAX reference.
    for g in range(B):
        (mu_r, sg_r), al_r = reference_forward(params, xb[g], eib[g], eab[g])
        assert jnp.allclose(mu_b[g], mu_r, atol=1e-4, rtol=1e-4)
        assert jnp.allclose(sg_b[g], sg_r, atol=1e-4, rtol=1e-4)
        assert jnp.allclose(al_b[g], al_r, atol=1e-4, rtol=1e-4)

    # Single-graph entry (module-equivalent signature) agrees too.
    (mu1, sg1), al1 = gnn_actor_forward(prep, xb[0], eib[0], eab[0])
    jax.block_until_ready((mu1, sg1, al1))
    assert jnp.allclose(mu1, mu_b[0], atol=1e-5, rtol=1e-5)
    assert jnp.allclose(sg1, sg_b[0], atol=1e-5, rtol=1e-5)
    assert jnp.allclose(al1, al_b[0], atol=1e-5, rtol=1e-5)

    print("KERNEL_OK")
</pallas_src>

<mosaic_0001>
module attributes {stable_mosaic.version = 11 : i64} {
  func.func @gnn_actor_kernel(%arg0: i32, %arg1: memref<1x1x48xi32, #tpu.memory_space<vmem>>, %arg2: memref<1x8x22xf32, #tpu.memory_space<vmem>>, %arg3: memref<1x24x22xf32, #tpu.memory_space<vmem>>, %arg4: memref<3x22x32xf32, #tpu.memory_space<vmem>>, %arg5: memref<2x32xf32, #tpu.memory_space<vmem>>, %arg6: memref<32x32xf32, #tpu.memory_space<vmem>>, %arg7: memref<64x3xf32, #tpu.memory_space<vmem>>, %arg8: memref<1x8x3xf32, #tpu.memory_space<vmem>>) attributes {dimension_semantics = [#tpu.dimension_semantics<parallel>], iteration_bounds = array<i64: 4>, scalar_prefetch = 0 : i64, scratch_operands = 0 : i64, tpu.core_type = #tpu.core_type<tc>, window_params = [{transform_indices = @transform_0, window_bounds = array<i64: 1, 1, 48>}, {transform_indices = @transform_1, window_bounds = array<i64: 1, 8, 22>}, {transform_indices = @transform_2, window_bounds = array<i64: 1, 24, 22>}, {pipeline_mode = #tpu.pipeline_mode<synchronous>, transform_indices = @transform_3, window_bounds = array<i64: 3, 22, 32>}, {pipeline_mode = #tpu.pipeline_mode<synchronous>, transform_indices = @transform_4, window_bounds = array<i64: 2, 32>}, {pipeline_mode = #tpu.pipeline_mode<synchronous>, transform_indices = @transform_5, window_bounds = array<i64: 32, 32>}, {pipeline_mode = #tpu.pipeline_mode<synchronous>, transform_indices = @transform_6, window_bounds = array<i64: 64, 3>}, {transform_indices = @transform_7, window_bounds = array<i64: 1, 8, 3>}]} {
    %c0 = arith.constant 0 : index
    %c0_0 = arith.constant 0 : index
    %c0_1 = arith.constant 0 : index
    %0 = vector.load %arg2[%c0, %c0_0, %c0_1] : memref<1x8x22xf32, #tpu.memory_space<vmem>>, vector<1x8x22xf32>
    %1 = vector.shape_cast %0 : vector<1x8x22xf32> to vector<8x22xf32>
    %c0_2 = arith.constant 0 : index
    %c0_3 = arith.constant 0 : index
    %c0_4 = arith.constant 0 : index
    %2 = vector.load %arg3[%c0_2, %c0_3, %c0_4] : memref<1x24x22xf32, #tpu.memory_space<vmem>>, vector<1x24x22xf32>
    %3 = vector.shape_cast %2 : vector<1x24x22xf32> to vector<24x22xf32>
    %c0_5 = arith.constant 0 : index
    %c0_6 = arith.constant 0 : index
    %c0_7 = arith.constant 0 : index
    %4 = vector.load %arg1[%c0_5, %c0_6, %c0_7] : memref<1x1x48xi32, #tpu.memory_space<vmem>>, vector<1x1x48xi32>
    %5 = vector.shape_cast %4 : vector<1x1x48xi32> to vector<1x48xi32>
    %6 = tpu.iota {dimensions = array<i32: 0>} : vector<8x48xi32>
    %7 = vector.broadcast %5 : vector<1x48xi32> to vector<8x48xi32>
    %8 = arith.cmpi eq, %7, %6 : vector<8x48xi32>
    %9 = arith.extui %8 : vector<8x48xi1> to vector<8x48xi32>
    %10 = arith.sitofp %9 : vector<8x48xi32> to vector<8x48xf32>
    %cst = arith.constant dense<0.000000e+00> : vector<48x22xf32>
    %11 = tpu.matmul %10, %1, %cst {dimension_numbers = #tpu.dot_dimension_numbers<[0], [0], [1], [1], [0, 1, 1, 1], [], []>} : vector<8x48xf32>, vector<8x22xf32>, vector<48x22xf32> -> vector<48x22xf32>
    %12 = vector.extract_strided_slice %11 {offsets = [0, 0], sizes = [24, 22], strides = [1, 1]} : vector<48x22xf32> to vector<24x22xf32>
    %13 = vector.extract_strided_slice %11 {offsets = [24, 0], sizes = [24, 22], strides = [1, 1]} : vector<48x22xf32> to vector<24x22xf32>
    %c0_8 = arith.constant 0 : index
    %c0_9 = arith.constant 0 : index
    %14 = vector.load %arg5[%c0_8, %c0_9] : memref<2x32xf32, #tpu.memory_space<vmem>>, vector<2x32xf32>
    %c0_10 = arith.constant 0 : index
    %c0_11 = arith.constant 0 : index
    %c0_12 = arith.constant 0 : index
    %15 = vector.load %arg4[%c0_10, %c0_11, %c0_12] : memref<3x22x32xf32, #tpu.memory_space<vmem>>, vector<1x22x32xf32>
    %16 = vector.shape_cast %15 : vector<1x22x32xf32> to vector<22x32xf32>
    %cst_13 = arith.constant dense<0.000000e+00> : vector<24x32xf32>
    %17 = tpu.matmul %12, %16, %cst_13 {dimension_numbers = #tpu.dot_dimension_numbers<[1], [0], [0], [1], [0, 0, 1, 1], [], []>} : vector<24x22xf32>, vector<22x32xf32>, vector<24x32xf32> -> vector<24x32xf32>
    %c1 = arith.constant 1 : index
    %c0_14 = arith.constant 0 : index
    %c0_15 = arith.constant 0 : index
    %18 = vector.load %arg4[%c1, %c0_14, %c0_15] : memref<3x22x32xf32, #tpu.memory_space<vmem>>, vector<1x22x32xf32>
    %19 = vector.shape_cast %18 : vector<1x22x32xf32> to vector<22x32xf32>
    %cst_16 = arith.constant dense<0.000000e+00> : vector<24x32xf32>
    %20 = tpu.matmul %13, %19, %cst_16 {dimension_numbers = #tpu.dot_dimension_numbers<[1], [0], [0], [1], [0, 0, 1, 1], [], []>} : vector<24x22xf32>, vector<22x32xf32>, vector<24x32xf32> -> vector<24x32xf32>
    %21 = arith.addf %17, %20 : vector<24x32xf32>
    %c2 = arith.constant 2 : index
    %c0_17 = arith.constant 0 : index
    %c0_18 = arith.constant 0 : index
    %22 = vector.load %arg4[%c2, %c0_17, %c0_18] : memref<3x22x32xf32, #tpu.memory_space<vmem>>, vector<1x22x32xf32>
    %23 = vector.shape_cast %22 : vector<1x22x32xf32> to vector<22x32xf32>
    %cst_19 = arith.constant dense<0.000000e+00> : vector<24x32xf32>
    %24 = tpu.matmul %3, %23, %cst_19 {dimension_numbers = #tpu.dot_dimension_numbers<[1], [0], [0], [1], [0, 0, 1, 1], [], []>} : vector<24x22xf32>, vector<22x32xf32>, vector<24x32xf32> -> vector<24x32xf32>
    %25 = arith.addf %21, %24 : vector<24x32xf32>
    %26 = vector.extract_strided_slice %14 {offsets = [0, 0], sizes = [1, 32], strides = [1, 1]} : vector<2x32xf32> to vector<1x32xf32>
    %27 = vector.broadcast %26 : vector<1x32xf32> to vector<24x32xf32>
    %28 = arith.addf %25, %27 : vector<24x32xf32>
    %cst_20 = arith.constant 0.000000e+00 : f32
    %29 = vector.broadcast %cst_20 : f32 to vector<24x32xf32>
    %30 = arith.maximumf %28, %29 : vector<24x32xf32>
    %c0_21 = arith.constant 0 : index
    %c0_22 = arith.constant 0 : index
    %31 = vector.load %arg6[%c0_21, %c0_22] : memref<32x32xf32, #tpu.memory_space<vmem>>, vector<32x32xf32>
    %cst_23 = arith.constant dense<0.000000e+00> : vector<24x32xf32>
    %32 = tpu.matmul %30, %31, %cst_23 {dimension_numbers = #tpu.dot_dimension_numbers<[1], [0], [0], [1], [0, 0, 1, 1], [], []>} : vector<24x32xf32>, vector<32x32xf32>, vector<24x32xf32> -> vector<24x32xf32>
    %33 = vector.extract_strided_slice %14 {offsets = [1, 0], sizes = [1, 32], strides = [1, 1]} : vector<2x32xf32> to vector<1x32xf32>
    %34 = vector.broadcast %33 : vector<1x32xf32> to vector<24x32xf32>
    %35 = arith.addf %32, %34 : vector<24x32xf32>
    %36 = vector.extract_strided_slice %10 {offsets = [0, 0], sizes = [8, 24], strides = [1, 1]} : vector<8x48xf32> to vector<8x24xf32>
    %cst_24 = arith.constant dense<0.000000e+00> : vector<8x32xf32>
    %37 = tpu.matmul %36, %35, %cst_24 {dimension_numbers = #tpu.dot_dimension_numbers<[1], [0], [0], [1], [0, 0, 1, 1], [], []>} : vector<8x24xf32>, vector<24x32xf32>, vector<8x32xf32> -> vector<8x32xf32>
    %c0_25 = arith.constant 0 : index
    %c0_26 = arith.constant 0 : index
    %38 = vector.load %arg7[%c0_25, %c0_26] : memref<64x3xf32, #tpu.memory_space<vmem>>, vector<64x3xf32>
    %39 = vector.extract_strided_slice %38 {offsets = [0, 0], sizes = [22, 3], strides = [1, 1]} : vector<64x3xf32> to vector<22x3xf32>
    %cst_27 = arith.constant dense<0.000000e+00> : vector<8x3xf32>
    %40 = tpu.matmul %1, %39, %cst_27 {dimension_numbers = #tpu.dot_dimension_numbers<[1], [0], [0], [1], [0, 0, 1, 1], [], []>} : vector<8x22xf32>, vector<22x3xf32>, vector<8x3xf32> -> vector<8x3xf32>
    %41 = vector.extract_strided_slice %38 {offsets = [24, 0], sizes = [32, 3], strides = [1, 1]} : vector<64x3xf32> to vector<32x3xf32>
    %cst_28 = arith.constant dense<0.000000e+00> : vector<8x3xf32>
    %42 = tpu.matmul %37, %41, %cst_28 {dimension_numbers = #tpu.dot_dimension_numbers<[1], [0], [0], [1], [0, 0, 1, 1], [], []>} : vector<8x32xf32>, vector<32x3xf32>, vector<8x3xf32> -> vector<8x3xf32>
    %43 = arith.addf %40, %42 : vector<8x3xf32>
    %44 = vector.extract_strided_slice %38 {offsets = [56, 0], sizes = [1, 3], strides = [1, 1]} : vector<64x3xf32> to vector<1x3xf32>
    %45 = vector.broadcast %44 : vector<1x3xf32> to vector<8x3xf32>
    %46 = arith.addf %43, %45 : vector<8x3xf32>
    %cst_29 = arith.constant 2.000000e+01 : f32
    %47 = vector.broadcast %cst_29 : f32 to vector<8x3xf32>
    %48 = arith.cmpf ogt, %46, %47 : vector<8x3xf32>
    %cst_30 = arith.constant 2.000000e+01 : f32
    %49 = vector.broadcast %cst_30 : f32 to vector<8x3xf32>
    %50 = arith.minimumf %46, %49 : vector<8x3xf32>
    %51 = math.exp %50 : vector<8x3xf32>
    %52 = math.log1p %51 : vector<8x3xf32>
    %53 = arith.select %48, %46, %52 : vector<8x3xi1>, vector<8x3xf32>
    %c0_31 = arith.constant 0 : index
    %c0_32 = arith.constant 0 : index
    %c0_33 = arith.constant 0 : index
    %54 = vector.load %arg8[%c0_31, %c0_32, %c0_33] : memref<1x8x3xf32, #tpu.memory_space<vmem>>, vector<1x8x3xf32>
    %55 = vector.shape_cast %54 : vector<1x8x3xf32> to vector<8x3xf32>
    %56 = vector.shape_cast %53 : vector<8x3xf32> to vector<1x8x3xf32>
    tpu.vector_store %arg8[%c0_31, %c0_32, %c0_33], %56 {strides = array<i32>} : memref<1x8x3xf32, #tpu.memory_space<vmem>>, vector<1x8x3xf32>,
    return
  }
  func.func @transform_0(%arg0: i32) -> (i32, i32, i32) {
    %c0_i32 = arith.constant 0 : i32
    %c0_i32_0 = arith.constant 0 : i32
    %c0_i32_1 = arith.constant 0 : i32
    return %arg0, %c0_i32, %c0_i32_0 : i32, i32, i32
  }
  func.func @transform_1(%arg0: i32) -> (i32, i32, i32) {
    %c0_i32 = arith.constant 0 : i32
    %c0_i32_0 = arith.constant 0 : i32
    %c0_i32_1 = arith.constant 0 : i32
    return %arg0, %c0_i32, %c0_i32_0 : i32, i32, i32
  }
  func.func @transform_2(%arg0: i32) -> (i32, i32, i32) {
    %c0_i32 = arith.constant 0 : i32
    %c0_i32_0 = arith.constant 0 : i32
    %c0_i32_1 = arith.constant 0 : i32
    return %arg0, %c0_i32, %c0_i32_0 : i32, i32, i32
  }
  func.func @transform_3(%arg0: i32) -> (i32, i32, i32) {
    %c0_i32 = arith.constant 0 : i32
    %c0_i32_0 = arith.constant 0 : i32
    %c0_i32_1 = arith.constant 0 : i32
    %c0_i32_2 = arith.constant 0 : i32
    return %c0_i32, %c0_i32_0, %c0_i32_1 : i32, i32, i32
  }
  func.func @transform_4(%arg0: i32) -> (i32, i32) {
    %c0_i32 = arith.constant 0 : i32
    %c0_i32_0 = arith.constant 0 : i32
    %c0_i32_1 = arith.constant 0 : i32
    return %c0_i32, %c0_i32_0 : i32, i32
  }
  func.func @transform_5(%arg0: i32) -> (i32, i32) {
    %c0_i32 = arith.constant 0 : i32
    %c0_i32_0 = arith.constant 0 : i32
    %c0_i32_1 = arith.constant 0 : i32
    return %c0_i32, %c0_i32_0 : i32, i32
  }
  func.func @transform_6(%arg0: i32) -> (i32, i32) {
    %c0_i32 = arith.constant 0 : i32
    %c0_i32_0 = arith.constant 0 : i32
    %c0_i32_1 = arith.constant 0 : i32
    return %c0_i32, %c0_i32_0 : i32, i32
  }
  func.func @transform_7(%arg0: i32) -> (i32, i32, i32) {
    %c0_i32 = arith.constant 0 : i32
    %c0_i32_0 = arith.constant 0 : i32
    %c0_i32_1 = arith.constant 0 : i32
    return %arg0, %c0_i32, %c0_i32_0 : i32, i32, i32
  }
}

</mosaic_0001>

<llo_original>
// kernel: gnn_actor_forward_batched.1
$region0: #{gnn_actor_forward_batched.1}
  #allocation0 [shape = 'u32[]', space=smem, size = 0x4, offset = 0x4, fixed_abs, tag = 'smem constant byte address 0x4 - core index']
  #allocation1 [shape = 'u32[72,128]{1,0:T(1,128)}', space=vmem, size = 0x9000, scoped, tag = 'internal scratch']
  %s0 = inlined_call_operand.vmem [shape: s32[4,1,48], index: 0, kind: input, shape index: {}]
  %s1 = inlined_call_operand.vmem [shape: f32[4,8,22], index: 1, kind: input, shape index: {}]
  %s2 = inlined_call_operand.vmem [shape: f32[4,24,22], index: 2, kind: input, shape index: {}]
  %s3 = inlined_call_operand.vmem [shape: f32[3,22,32], index: 3, kind: input, shape index: {}]
  %s4 = inlined_call_operand.vmem [shape: f32[2,32], index: 4, kind: input, shape index: {}]
  %s5 = inlined_call_operand.vmem [shape: f32[32,32], index: 5, kind: input, shape index: {}]
  %s6 = inlined_call_operand.vmem [shape: f32[64,3], index: 6, kind: input, shape index: {}]
  %s7 = inlined_call_operand.vmem [shape: f32[4,8,3], index: 7, kind: output, shape index: {}]
  %s8 = sld [smem:[#allocation0]]
  $region61: #{gnn_actor_forward_batched.1} parent=0
    _
  %s10 = ssub.s32 1, %s8
  %s11 = scalar_select 0, %s10, %s8
  loop: start=0, step=1, limit=6
  $region2: #{gnn_actor_forward_batched.1} parent=0 // loop_pre_header
    _
  $region3: #{gnn_actor_forward_batched.1} parent=0 // loop_header
    %s13 = sphi 0, %s17
    %p14 = scmp.ge.s32.totalorder %s13, 6
    %s23 = sphi 0, %s25
    %s26 = sphi 0, %s23
    %s27 = sphi 0, %s26
    %s43 = sphi 0, %s27
    %s49 = sphi 0, %s51
    %s52 = sphi 0, %s49
    %s53 = sphi 0, %s52
    %s69 = sphi 0, %s53
    %s75 = sphi 0, %s77
    %s78 = sphi 0, %s75
    %s79 = sphi 0, %s78
    %s95 = sphi 0, %s79
    %s99 = sphi 0, %s99
    %s101 = sphi 0, %s99
    %s102 = sphi 0, %s101
    %s116 = sphi 0, %s102
    %s120 = sphi 0, %s120
    %s122 = sphi 0, %s120
    %s123 = sphi 0, %s122
    %s137 = sphi 0, %s123
    %s141 = sphi 0, %s141
    %s143 = sphi 0, %s141
    %s144 = sphi 0, %s143
    %s158 = sphi 0, %s144
    %s162 = sphi 0, %s162
    %s164 = sphi 0, %s162
    %s165 = sphi 0, %s164
    %s179 = sphi 0, %s165
    %s185 = sphi 0, %s187
    %s188 = sphi 0, %s185
    %s189 = sphi 0, %s188
    %s205 = sphi 0, %s189
  $region4: #{gnn_actor_forward_batched.1} parent=0 // loop_header_branch
    %16 = sbr.rel (%p14) target = $region8
  $region5: #{gnn_actor_forward_batched.1} parent=0 // loop_body
    %s18 = ssub.s32 %s13, 1
    %s19 = ssub.s32 %s13, 2
    %s20 = sadd.s32 %s13, 1
    %s21 = ssub.s32 %s13, %s20
    %p22 = scmp.eq.s32.totalorder %s21, 0
    %s24 = sadd.s32 %s23, 1
    %s25 = scalar_select %p22, %s23, %s24
    %p28 = pneg %p22
    %p29 = scmp.eq.s32.totalorder %s13, 3
    %p30 = por %p28, %p29
    %p31 = scmp.ne.s32.totalorder %s23, %s26
    %p32 = scmp.eq.s32.totalorder %s13, 0
    %p33 = por %p31, %p32
    %p34 = scmp.ne.s32.totalorder %s23, %s26
    %p35 = scmp.eq.s32.totalorder %s18, 3
    %p36 = por %p34, %p35
    %p37 = scmp.ne.s32.totalorder %s26, %s27
    %p38 = scmp.eq.s32.totalorder %s18, 0
    %p39 = por %p37, %p38
    %p40 = scmp.ne.s32.totalorder %s26, %s27
    %p41 = scmp.eq.s32.totalorder %s19, 3
    %p42 = por %p40, %p41
    %p44 = scmp.ne.s32.totalorder %s27, %s43
    %p45 = scmp.eq.s32.totalorder %s19, 0
    %p46 = por %p44, %p45
    %s47 = ssub.s32 %s13, %s20
    %p48 = scmp.eq.s32.totalorder %s47, 0
    %s50 = sadd.s32 %s49, 1
    %s51 = scalar_select %p48, %s49, %s50
    %p54 = pneg %p48
    %p55 = scmp.eq.s32.totalorder %s13, 3
    %p56 = por %p54, %p55
    %p57 = scmp.ne.s32.totalorder %s49, %s52
    %p58 = scmp.eq.s32.totalorder %s13, 0
    %p59 = por %p57, %p58
    %p60 = scmp.ne.s32.totalorder %s49, %s52
    %p61 = scmp.eq.s32.totalorder %s18, 3
    %p62 = por %p60, %p61
    %p63 = scmp.ne.s32.totalorder %s52, %s53
    %p64 = scmp.eq.s32.totalorder %s18, 0
    %p65 = por %p63, %p64
    %p66 = scmp.ne.s32.totalorder %s52, %s53
    %p67 = scmp.eq.s32.totalorder %s19, 3
    %p68 = por %p66, %p67
    %p70 = scmp.ne.s32.totalorder %s53, %s69
    %p71 = scmp.eq.s32.totalorder %s19, 0
    %p72 = por %p70, %p71
    %s73 = ssub.s32 %s13, %s20
    %p74 = scmp.eq.s32.totalorder %s73, 0
    %s76 = sadd.s32 %s75, 1
    %s77 = scalar_select %p74, %s75, %s76
    %p80 = pneg %p74
    %p81 = scmp.eq.s32.totalorder %s13, 3
    %p82 = por %p80, %p81
    %p83 = scmp.ne.s32.totalorder %s75, %s78
    %p84 = scmp.eq.s32.totalorder %s13, 0
    %p85 = por %p83, %p84
    %p86 = scmp.ne.s32.totalorder %s75, %s78
    %p87 = scmp.eq.s32.totalorder %s18, 3
    %p88 = por %p86, %p87
    %p89 = scmp.ne.s32.totalorder %s78, %s79
    %p90 = scmp.eq.s32.totalorder %s18, 0
    %p91 = por %p89, %p90
    %p92 = scmp.ne.s32.totalorder %s78, %s79
    %p93 = scmp.eq.s32.totalorder %s19, 3
    %p94 = por %p92, %p93
    %p96 = scmp.ne.s32.totalorder %s79, %s95
    %p97 = scmp.eq.s32.totalorder %s19, 0
    %p98 = por %p96, %p97
    %s100 = sadd.s32 %s99, 1
    %p103 = scmp.eq.s32.totalorder %s13, 3
    %p104 = scmp.ne.s32.totalorder %s99, %s101
    %p105 = scmp.eq.s32.totalorder %s13, 0
    %p106 = por %p104, %p105
    %p107 = scmp.ne.s32.totalorder %s99, %s101
    %p108 = scmp.eq.s32.totalorder %s18, 3
    %p109 = por %p107, %p108
    %p110 = scmp.ne.s32.totalorder %s101, %s102
    %p111 = scmp.eq.s32.totalorder %s18, 0
    %p112 = por %p110, %p111
    %p113 = scmp.ne.s32.totalorder %s101, %s102
    %p114 = scmp.eq.s32.totalorder %s19, 3
    %p115 = por %p113, %p114
    %p117 = scmp.ne.s32.totalorder %s102, %s116
    %p118 = scmp.eq.s32.totalorder %s19, 0
    %p119 = por %p117, %p118
    %s121 = sadd.s32 %s120, 1
    %p124 = scmp.eq.s32.totalorder %s13, 3
    %p125 = scmp.ne.s32.totalorder %s120, %s122
    %p126 = scmp.eq.s32.totalorder %s13, 0
    %p127 = por %p125, %p126
    %p128 = scmp.ne.s32.totalorder %s120, %s122
    %p129 = scmp.eq.s32.totalorder %s18, 3
    %p130 = por %p128, %p129
    %p131 = scmp.ne.s32.totalorder %s122, %s123
    %p132 = scmp.eq.s32.totalorder %s18, 0
    %p133 = por %p131, %p132
    %p134 = scmp.ne.s32.totalorder %s122, %s123
    %p135 = scmp.eq.s32.totalorder %s19, 3
    %p136 = por %p134, %p135
    %p138 = scmp.ne.s32.totalorder %s123, %s137
    %p139 = scmp.eq.s32.totalorder %s19, 0
    %p140 = por %p138, %p139
    %s142 = sadd.s32 %s141, 1
    %p145 = scmp.eq.s32.totalorder %s13, 3
    %p146 = scmp.ne.s32.totalorder %s141, %s143
    %p147 = scmp.eq.s32.totalorder %s13, 0
    %p148 = por %p146, %p147
    %p149 = scmp.ne.s32.totalorder %s141, %s143
    %p150 = scmp.eq.s32.totalorder %s18, 3
    %p151 = por %p149, %p150
    %p152 = scmp.ne.s32.totalorder %s143, %s144
    %p153 = scmp.eq.s32.totalorder %s18, 0
    %p154 = por %p152, %p153
    %p155 = scmp.ne.s32.totalorder %s143, %s144
    %p156 = scmp.eq.s32.totalorder %s19, 3
    %p157 = por %p155, %p156
    %p159 = scmp.ne.s32.totalorder %s144, %s158
    %p160 = scmp.eq.s32.totalorder %s19, 0
    %p161 = por %p159, %p160
    %s163 = sadd.s32 %s162, 1
    %p166 = scmp.eq.s32.totalorder %s13, 3
    %p167 = scmp.ne.s32.totalorder %s162, %s164
    %p168 = scmp.eq.s32.totalorder %s13, 0
    %p169 = por %p167, %p168
    %p170 = scmp.ne.s32.totalorder %s162, %s164
    %p171 = scmp.eq.s32.totalorder %s18, 3
    %p172 = por %p170, %p171
    %p173 = scmp.ne.s32.totalorder %s164, %s165
    %p174 = scmp.eq.s32.totalorder %s18, 0
    %p175 = por %p173, %p174
    %p176 = scmp.ne.s32.totalorder %s164, %s165
    %p177 = scmp.eq.s32.totalorder %s19, 3
    %p178 = por %p176, %p177
    %p180 = scmp.ne.s32.totalorder %s165, %s179
    %p181 = scmp.eq.s32.totalorder %s19, 0
    %p182 = por %p180, %p181
    %s183 = ssub.s32 %s13, %s20
    %p184 = scmp.eq.s32.totalorder %s183, 0
    %s186 = sadd.s32 %s185, 1
    %s187 = scalar_select %p184, %s185, %s186
    %p190 = pneg %p184
    %p191 = scmp.eq.s32.totalorder %s13, 3
    %p192 = por %p190, %p191
    %p193 = scmp.ne.s32.totalorder %s185, %s188
    %p194 = scmp.eq.s32.totalorder %s13, 0
    %p195 = por %p193, %p194
    %p196 = scmp.ne.s32.totalorder %s185, %s188
    %p197 = scmp.eq.s32.totalorder %s18, 3
    %p198 = por %p196, %p197
    %p199 = scmp.ne.s32.totalorder %s188, %s189
    %p200 = scmp.eq.s32.totalorder %s18, 0
    %p201 = por %p199, %p200
    %p202 = scmp.ne.s32.totalorder %s188, %s189
    %p203 = scmp.eq.s32.totalorder %s19, 3
    %p204 = por %p202, %p203
    %p206 = scmp.ne.s32.totalorder %s189, %s205
    %p207 = scmp.eq.s32.totalorder %s19, 0
    %p208 = por %p206, %p207
    %p209 = scmp.le.s32.totalorder 1, %s13
    %p210 = scmp.lt.s32.totalorder %s13, 5
    %p211 = pnand %p209, %p210
    %p212 = pneg %p211
    // Predicated region
    $region9: #{gnn_actor_forward_batched.1} parent=5 // pred_check
      _
    $region10: #{gnn_actor_forward_batched.1} parent=5 // pred_check_branch
      %214 = sbr.rel (%p211) target = $region12
    $region11: #{gnn_actor_forward_batched.1} parent=5 // pred_region
      %s215 = ssub.s32 %s13, 1
      // Predicated region
      $region13: #{gnn_actor_forward_batched.1} parent=11 // pred_check
        %p216 = pneg %p112
      $region14: #{gnn_actor_forward_batched.1} parent=11 // pred_check_branch
        %218 = sbr.rel (%p216) target = $region16
      $region15: #{gnn_actor_forward_batched.1} parent=11 // pred_region
        _
      $region16: #{gnn_actor_forward_batched.1} parent=11 // pred_fallthru
        _
      // Predicated region
      $region17: #{gnn_actor_forward_batched.1} parent=11 // pred_check
        %p219 = pneg %p133
      $region18: #{gnn_actor_forward_batched.1} parent=11 // pred_check_branch
        %221 = sbr.rel (%p219) target = $region20
      $region19: #{gnn_actor_forward_batched.1} parent=11 // pred_region
        _
      $region20: #{gnn_actor_forward_batched.1} parent=11 // pred_fallthru
        _
      // Predicated region
      $region21: #{gnn_actor_forward_batched.1} parent=11 // pred_check
        %p222 = pneg %p154
      $region22: #{gnn_actor_forward_batched.1} parent=11 // pred_check_branch
        %224 = sbr.rel (%p222) target = $region24
      $region23: #{gnn_actor_forward_batched.1} parent=11 // pred_region
        _
      $region24: #{gnn_actor_forward_batched.1} parent=11 // pred_fallthru
        _
      // Predicated region
      $region25: #{gnn_actor_forward_batched.1} parent=11 // pred_check
        %p225 = pneg %p175
      $region26: #{gnn_actor_forward_batched.1} parent=11 // pred_check_branch
        %227 = sbr.rel (%p225) target = $region28
      $region27: #{gnn_actor_forward_batched.1} parent=11 // pred_region
        _
      $region28: #{gnn_actor_forward_batched.1} parent=11 // pred_fallthru
        _
    $region12: #{gnn_actor_forward_batched.1} parent=5 // pred_fallthru
      _
    %p228 = scmp.lt.s32.totalorder %s13, 4
    // Predicated region
    $region29: #{gnn_actor_forward_batched.1} parent=5 // pred_check
      %p229 = pneg %p228
    $region30: #{gnn_actor_forward_batched.1} parent=5 // pred_check_branch
      %231 = sbr.rel (%p229) target = $region32
    $region31: #{gnn_actor_forward_batched.1} parent=5 // pred_region
      // Predicated region
      $region33: #{gnn_actor_forward_batched.1} parent=31 // pred_check
        %p232 = pneg %p33
      $region34: #{gnn_actor_forward_batched.1} parent=31 // pred_check_branch
        %234 = sbr.rel (%p232) target = $region36
      $region35: #{gnn_actor_forward_batched.1} parent=31 // pred_region
        %p235 = scmp.lt.s32.totalorder %s13, 3
        %s236 = scalar_select %p235, %s13, 3
        %s237 = scalar_lea.vmem %s0, %s236
      $region36: #{gnn_actor_forward_batched.1} parent=31 // pred_fallthru
        _
      // Predicated region
      $region37: #{gnn_actor_forward_batched.1} parent=31 // pred_check
        %p238 = pneg %p59
      $region38: #{gnn_actor_forward_batched.1} parent=31 // pred_check_branch
        %240 = sbr.rel (%p238) target = $region40
      $region39: #{gnn_actor_forward_batched.1} parent=31 // pred_region
        %p241 = scmp.lt.s32.totalorder %s13, 3
        %s242 = scalar_select %p241, %s13, 3
        %s243 = smul.addr %s242, 8
        %s244 = scalar_lea.vmem %s1, %s243
      $region40: #{gnn_actor_forward_batched.1} parent=31 // pred_fallthru
        _
      // Predicated region
      $region41: #{gnn_actor_forward_batched.1} parent=31 // pred_check
        %p245 = pneg %p85
      $region42: #{gnn_actor_forward_batched.1} parent=31 // pred_check_branch
        %247 = sbr.rel (%p245) target = $region44
      $region43: #{gnn_actor_forward_batched.1} parent=31 // pred_region
        %p248 = scmp.lt.s32.totalorder %s13, 3
        %s249 = scalar_select %p248, %s13, 3
        %s250 = smul.addr %s249, 3
        %s251 = smul.addr %s250, 8
        %s252 = scalar_lea.vmem %s2, %s251
      $region44: #{gnn_actor_forward_batched.1} parent=31 // pred_fallthru
        _
    $region32: #{gnn_actor_forward_batched.1} parent=5 // pred_fallthru
      _
    %p253 = scmp.le.s32.totalorder 1, %s13
    %p254 = scmp.lt.s32.totalorder %s13, 5
    %p255 = pnand %p253, %p254
    %p256 = pneg %p255
    // Predicated region
    $region45: #{gnn_actor_forward_batched.1} parent=5 // pred_check
      _
    $region46: #{gnn_actor_forward_batched.1} parent=5 // pred_check_branch
      %258 = sbr.rel (%p255) target = $region48
    $region47: #{gnn_actor_forward_batched.1} parent=5 // pred_region
      %s259 = ssub.s32 %s13, 1
      %p260 = scmp.lt.s32.totalorder %s18, 3
      %s261 = scalar_select %p260, %s18, 3
      %s262 = scalar_lea.vmem %s0, %s261
      %p263 = pneg %p39
      %p264 = pneg %p36
      %p265 = scmp.lt.s32.totalorder %s18, 3
      %s266 = scalar_select %p265, %s18, 3
      %s267 = smul.addr %s266, 8
      %s268 = scalar_lea.vmem %s1, %s267
      %p269 = pneg %p65
      %p270 = pneg %p62
      %p271 = scmp.lt.s32.totalorder %s18, 3
      %s272 = scalar_select %p271, %s18, 3
      %s273 = smul.addr %s272, 3
      %s274 = smul.addr %s273, 8
      %s275 = scalar_lea.vmem %s2, %s274
      %p276 = pneg %p91
      %p277 = pneg %p88
      %p278 = pneg %p112
      %p279 = pneg %p109
      %p280 = pneg %p133
      %p281 = pneg %p130
      %p282 = pneg %p154
      %p283 = pneg %p151
      %p284 = pneg %p175
      %p285 = pneg %p172
      %p286 = pneg %p201
      %p287 = pneg %p198
      %p288 = scmp.lt.s32.totalorder %s18, 3
      %s289 = scalar_select %p288, %s18, 3
      %s290 = smul.addr %s289, 8
      %s291 = scalar_lea.vmem %s7, %s290
      %p292 = scmp.lt.s32.totalorder %s18, 3
      %s293 = scalar_select %p292, %s18, 3
      %s294 = scalar_lea.vmem %s0, %s293
      %p295 = scmp.lt.s32.totalorder %s18, 3
      %s296 = scalar_select %p295, %s18, 3
      %s297 = smul.addr %s296, 8
      %s298 = scalar_lea.vmem %s1, %s297
      %p299 = scmp.lt.s32.totalorder %s18, 3
      %s300 = scalar_select %p299, %s18, 3
      %s301 = smul.addr %s300, 3
      %s302 = smul.addr %s301, 8
      %s303 = scalar_lea.vmem %s2, %s302
      %p304 = scmp.lt.s32.totalorder %s18, 3
      %s305 = scalar_select %p304, %s18, 3
      %s306 = smul.addr %s305, 8
      %s307 = scalar_lea.vmem %s7, %s306
      %v308 = vld [vmem:[%s298] sm:$0xff]
      %v309 = vld [vmem:[%s303] sm:$0xff]
      %v310 = vld [vmem:[%s303 + $0x8] sm:$0xff]
      %v311 = vld [vmem:[%s303 + $0x10] sm:$0xff]
      %v312 = vld [vmem:[%s294] sm:$0x1]
      %v313 = vlaneseq
      %v314 = vshrl.u32 %v313, 7
      %v315 = vperm.slane %v312, 0
      %vm316 = vcmp.eq.s32.totalorder %v315, %v314
      %v317 = vsel %vm316, 1, 0
      %v318 = vcvt.s32.f32 %v317
      %319 = vxpose.xlu0.b32.start [1/16] %v318, 128
      %320 = vxpose.xlu0.b32.cont [2/16] 0.0, 128
      %321 = vxpose.xlu0.b32.cont [3/16] 0.0, 128
      %322 = vxpose.xlu0.b32.cont [4/16] 0.0, 128
      %323 = vxpose.xlu0.b32.cont [5/16] 0.0, 128
      %324 = vxpose.xlu0.b32.cont [6/16] 0.0, 128
      %325 = vxpose.xlu0.b32.cont [7/16] 0.0, 128
      %326 = vxpose.xlu0.b32.cont [8/16] 0.0, 128
      %327 = vxpose.xlu0.b32.cont [9/16] 0.0, 128
      %328 = vxpose.xlu0.b32.cont [10/16] 0.0, 128
      %329 = vxpose.xlu0.b32.cont [11/16] 0.0, 128
      %330 = vxpose.xlu0.b32.cont [12/16] 0.0, 128
      %331 = vxpose.xlu0.b32.cont [13/16] 0.0, 128
      %332 = vxpose.xlu0.b32.cont [14/16] 0.0, 128
      %333 = vxpose.xlu0.b32.cont [15/16] 0.0, 128
      %334 = vxpose.xlu0.b32.end [16/16] 0.0, 128
      %v335 = vpop.trf.xlu0
      %v336 = vpop.trf.xlu0
      %v337 = vpop.trf.xlu0
      %v338 = vpop.trf.xlu0
      %v339 = vpop.trf.xlu0
      %v340 = vpop.trf.xlu0
      %v341 = vpop.trf.xlu0
      %v342 = vpop.trf.xlu0
      %v343 = vpop.trf.xlu0
      %v344 = vpop.trf.xlu0
      %v345 = vpop.trf.xlu0
      %v346 = vpop.trf.xlu0
      %v347 = vpop.trf.xlu0
      %v348 = vpop.trf.xlu0
      %v349 = vpop.trf.xlu0
      %v350 = vpop.trf.xlu0
      %vm351 = vcmask 64512
      %v353 = vsel %vm351, %v335, 0
      %v356 = vsel %vm351, %v336, 0
      %v359 = vsel %vm351, %v337, 0
      %v362 = vsel %vm351, %v338, 0
      %v365 = vsel %vm351, %v339, 0
      %v368 = vsel %vm351, %v340, 0
      %370 = vmatpush.msra.mxu0 0.0
      %371 = vmatpush.msra.mxu0 0.0
      %372 = vmatpush.msra.mxu0 0.0
      %373 = vmatpush.msra.mxu0 0.0
      %374 = vmatpush.msra.mxu0 0.0
      %375 = vmatpush.msra.mxu0 0.0
      %376 = vmatpush.msra.mxu0 0.0
      %377 = vmatpush.msra.mxu0 0.0
      %378 = vmatpush.msra.mxu0 0.0
      %379 = vmatpush.msra.mxu0 0.0
      %380 = vmatpush.msra.mxu0 0.0
      %381 = vmatpush.msra.mxu0 0.0
      %382 = vmatpush.msra.mxu0 0.0
      %383 = vmatpush.msra.mxu0 0.0
      %384 = vmatpush.msra.mxu0 0.0
      %385 = vmatpush.msra.mxu0 %v308
      %386 = vmatmul.f32.gmra.mxu0 %v353
      %v387 = vpop.f32.mrf.mxu0
      %v388 = vadd.f32 0.0, %v387
      %389 = vmatmul.f32.gmra.mxu0 %v356
      %v390 = vpop.f32.mrf.mxu0
      %v391 = vadd.f32 0.0, %v390
      %392 = vmatmul.f32.gmra.mxu0 %v359
      %v393 = vpop.f32.mrf.mxu0
      %v394 = vadd.f32 0.0, %v393
      %395 = vmatmul.f32.gmra.mxu0 %v362
      %v396 = vpop.f32.mrf.mxu0
      %v397 = vadd.f32 0.0, %v396
      %398 = vmatmul.f32.gmra.mxu0 %v365
      %v399 = vpop.f32.mrf.mxu0
      %v400 = vadd.f32 0.0, %v399
      %401 = vmatmul.f32.gmra.mxu0 %v368
      %v402 = vpop.f32.mrf.mxu0
      %v403 = vadd.f32 0.0, %v402
      %404 = vdwg.mxu0
      %v405 = vld [vmem:[%s4] sm:$0x3]
      %v406 = vld [vmem:[%s3] sm:$0xff]
      %v407 = vld [vmem:[%s3 + $0x8] sm:$0xff]
      %v408 = vld [vmem:[%s3 + $0x10] sm:$0x3f]
      %s409 = scalar_lea.vmem %s3, 24
      %v410 = vld [vmem:[%s409] sm:$0xff]
      %v411 = vld [vmem:[%s409 + $0x8] sm:$0xff]
      %v412 = vld [vmem:[%s409 + $0x10] sm:$0x3f]
      %vm413 = vcmask 179200
      %v415 = vsel %vm413, %v397, 0
      %v418 = vsel %vm413, %v400, 0
      %v421 = vsel %vm413, %v403, 0
      %vm423 = vcmask 1045504
      %v425 = vsel %vm423, %v412, 0
      %427 = vmatpush.msra.mxu0 0.0
      %428 = vmatpush.msra.mxu0 0.0
      %429 = vmatpush.msra.mxu0 0.0
      %430 = vmatpush.msra.mxu0 0.0
      %431 = vmatpush.msra.mxu0 0.0
      %432 = vmatpush.msra.mxu0 0.0
      %433 = vmatpush.msra.mxu0 0.0
      %434 = vmatpush.msra.mxu0 0.0
      %435 = vmatpush.msra.mxu0 0.0
      %436 = vmatpush.msra.mxu0 0.0
      %437 = vmatpush.msra.mxu0 0.0
      %438 = vmatpush.msra.mxu0 0.0
      %439 = vmatpush.msra.mxu0 0.0
      %440 = vmatpush.msra.mxu0 %v425
      %441 = vmatpush.msra.mxu0 %v411
      %442 = vmatpush.msra.mxu0 %v410
      %443 = vmatmul.f32.gmra.mxu0 %v415
      %v444 = vpop.f32.mrf.mxu0
      %v445 = vadd.f32 0.0, %v444
      %446 = vmatmul.f32.gmra.mxu0 %v418
      %v447 = vpop.f32.mrf.mxu0
      %v448 = vadd.f32 0.0, %v447
      %449 = vmatmul.f32.gmra.mxu0 %v421
      %v450 = vpop.f32.mrf.mxu0
      %v451 = vadd.f32 0.0, %v450
      %452 = vdwg.mxu0
      %v454 = vsel %vm413, %v388, 0
      %v457 = vsel %vm413, %v391, 0
      %v460 = vsel %vm413, %v394, 0
      %v463 = vsel %vm423, %v408, 0
      %465 = vmatpush.msra.mxu0 0.0
      %466 = vmatpush.msra.mxu0 0.0
      %467 = vmatpush.msra.mxu0 0.0
      %468 = vmatpush.msra.mxu0 0.0
      %469 = vmatpush.msra.mxu0 0.0
      %470 = vmatpush.msra.mxu0 0.0
      %471 = vmatpush.msra.mxu0 0.0
      %472 = vmatpush.msra.mxu0 0.0
      %473 = vmatpush.msra.mxu0 0.0
      %474 = vmatpush.msra.mxu0 0.0
      %475 = vmatpush.msra.mxu0 0.0
      %476 = vmatpush.msra.mxu0 0.0
      %477 = vmatpush.msra.mxu0 0.0
      %478 = vmatpush.msra.mxu0 %v463
      %479 = vmatpush.msra.mxu0 %v407
      %480 = vmatpush.msra.mxu0 %v406
      %481 = vmatmul.f32.gmra.mxu0 %v454
      %v482 = vpop.f32.mrf.mxu0
      %v483 = vadd.f32 %v445, %v482
      %484 = vmatmul.f32.gmra.mxu0 %v457
      %v485 = vpop.f32.mrf.mxu0
      %v486 = vadd.f32 %v448, %v485
      %487 = vmatmul.f32.gmra.mxu0 %v460
      %v488 = vpop.f32.mrf.mxu0
      %v489 = vadd.f32 %v451, %v488
      %490 = vdwg.mxu0
      %s491 = scalar_lea.vmem %s3, 48
      %v492 = vld [vmem:[%s491] sm:$0xff]
      %v493 = vld [vmem:[%s491 + $0x8] sm:$0xff]
      %v494 = vld [vmem:[%s491 + $0x10] sm:$0x3f]
      %v496 = vsel %vm413, %v309, 0
      %v499 = vsel %vm413, %v310, 0
      %v502 = vsel %vm413, %v311, 0
      %v505 = vsel %vm423, %v494, 0
      %507 = vmatpush.msra.mxu0 0.0
      %508 = vmatpush.msra.mxu0 0.0
      %509 = vmatpush.msra.mxu0 0.0
      %510 = vmatpush.msra.mxu0 0.0
      %511 = vmatpush.msra.mxu0 0.0
      %512 = vmatpush.msra.mxu0 0.0
      %513 = vmatpush.msra.mxu0 0.0
      %514 = vmatpush.msra.mxu0 0.0
      %515 = vmatpush.msra.mxu0 0.0
      %516 = vmatpush.msra.mxu0 0.0
      %517 = vmatpush.msra.mxu0 0.0
      %518 = vmatpush.msra.mxu0 0.0
      %519 = vmatpush.msra.mxu0 0.0
      %520 = vmatpush.msra.mxu0 %v505
      %521 = vmatpush.msra.mxu0 %v493
      %522 = vmatpush.msra.mxu0 %v492
      %523 = vmatmul.f32.gmra.mxu0 %v496
      %v524 = vpop.f32.mrf.mxu0
      %v525 = vadd.f32 0.0, %v524
      %526 = vmatmul.f32.gmra.mxu0 %v499
      %v527 = vpop.f32.mrf.mxu0
      %v528 = vadd.f32 0.0, %v527
      %529 = vmatmul.f32.gmra.mxu0 %v502
      %v530 = vpop.f32.mrf.mxu0
      %v531 = vadd.f32 0.0, %v530
      %532 = vdwg.mxu0
      %v533 = vadd.f32 %v483, %v525
      %v534 = vadd.f32 %v486, %v528
      %v535 = vadd.f32 %v489, %v531
      %v536 = vperm.slane %v405, 0
      %v537 = vadd.f32 %v533, %v536
      %v538 = vadd.f32 %v534, %v536
      %v539 = vadd.f32 %v535, %v536
      %v540 = vmax.f32 %v537, 0.0
      %v541 = vmax.f32 %v538, 0.0
      %v542 = vmax.f32 %v539, 0.0
      %v543 = vld [vmem:[%s5] sm:$0xff]
      %v544 = vld [vmem:[%s5 + $0x8] sm:$0xff]
      %v545 = vld [vmem:[%s5 + $0x10] sm:$0xff]
      %v546 = vld [vmem:[%s5 + $0x18] sm:$0xff]
      %v547 = vperm.slane %v405, 1
      %vm548 = vcmask 261120
      %v550 = vsel %vm548, %v540, 0
      %v553 = vsel %vm548, %v541, 0
      %v556 = vsel %vm548, %v542, 0
      %558 = vmatpush.msra.mxu0 0.0
      %559 = vmatpush.msra.mxu0 0.0
      %560 = vmatpush.msra.mxu0 0.0
      %561 = vmatpush.msra.mxu0 0.0
      %562 = vmatpush.msra.mxu0 0.0
      %563 = vmatpush.msra.mxu0 0.0
      %564 = vmatpush.msra.mxu0 0.0
      %565 = vmatpush.msra.mxu0 0.0
      %566 = vmatpush.msra.mxu0 0.0
      %567 = vmatpush.msra.mxu0 0.0
      %568 = vmatpush.msra.mxu0 0.0
      %569 = vmatpush.msra.mxu0 0.0
      %570 = vmatpush.msra.mxu0 %v546
      %571 = vmatpush.msra.mxu0 %v545
      %572 = vmatpush.msra.mxu0 %v544
      %573 = vmatpush.msra.mxu0 %v543
      %574 = vmatmul.f32.gmra.mxu0 %v550
      %v575 = vpop.f32.mrf.mxu0
      %v576 = vadd.f32 %v547, %v575
      %577 = vmatmul.f32.gmra.mxu0 %v553
      %v578 = vpop.f32.mrf.mxu0
      %v579 = vadd.f32 %v547, %v578
      %580 = vmatmul.f32.gmra.mxu0 %v556
      %v581 = vpop.f32.mrf.mxu0
      %v582 = vadd.f32 %v547, %v581
      %583 = vdwg.mxu0
      %vm584 = vcmask 195584
      %v586 = vsel %vm584, %v318, 0
      %588 = vmatpush.msra.mxu0 0.0
      %589 = vmatpush.msra.mxu0 0.0
      %590 = vmatpush.msra.mxu0 0.0
      %591 = vmatpush.msra.mxu0 0.0
      %592 = vmatpush.msra.mxu0 0.0
      %593 = vmatpush.msra.mxu0 0.0
      %594 = vmatpush.msra.mxu0 0.0
      %595 = vmatpush.msra.mxu0 0.0
      %596 = vmatpush.msra.mxu0 0.0
      %597 = vmatpush.msra.mxu0 0.0
      %598 = vmatpush.msra.mxu0 0.0
      %599 = vmatpush.msra.mxu0 0.0
      %600 = vmatpush.msra.mxu0 0.0
      %601 = vmatpush.msra.mxu0 %v582
      %602 = vmatpush.msra.mxu0 %v579
      %603 = vmatpush.msra.mxu0 %v576
      %604 = vmatmul.f32.gmra.mxu0 %v586
      %v605 = vpop.f32.mrf.mxu0
      %v606 = vadd.f32 0.0, %v605
      %607 = vdwg.mxu0
      %v608 = vld [vmem:[%s6] sm:$0xff]
      %v609 = vld [vmem:[%s6 + $0x8] sm:$0xff]
      %v610 = vld [vmem:[%s6 + $0x10] sm:$0xff]
      %v611 = vld [vmem:[%s6 + $0x18] sm:$0xff]
      %v612 = vld [vmem:[%s6 + $0x20] sm:$0xff]
      %v613 = vld [vmem:[%s6 + $0x28] sm:$0xff]
      %v614 = vld [vmem:[%s6 + $0x30] sm:$0xff]
      %v615 = vld [vmem:[%s6 + $0x38] sm:$0xff]
      %v617 = vsel %vm548, %v606, 0
      %619 = vmatpush.msra.mxu0 0.0
      %620 = vmatpush.msra.mxu0 0.0
      %621 = vmatpush.msra.mxu0 0.0
      %622 = vmatpush.msra.mxu0 0.0
      %623 = vmatpush.msra.mxu0 0.0
      %624 = vmatpush.msra.mxu0 0.0
      %625 = vmatpush.msra.mxu0 0.0
      %626 = vmatpush.msra.mxu0 0.0
      %627 = vmatpush.msra.mxu0 0.0
      %628 = vmatpush.msra.mxu0 0.0
      %629 = vmatpush.msra.mxu0 0.0
      %630 = vmatpush.msra.mxu0 0.0
      %631 = vmatpush.msra.mxu0 %v614
      %632 = vmatpush.msra.mxu0 %v613
      %633 = vmatpush.msra.mxu0 %v612
      %634 = vmatpush.msra.mxu0 %v611
      %635 = vmatmul.f32.gmra.mxu0 %v617
      %v636 = vpop.f32.mrf.mxu0
      %v637 = vadd.f32 0.0, %v636
      %638 = vdwg.mxu0
      %v640 = vsel %vm413, %v308, 0
      %v643 = vsel %vm423, %v610, 0
      %645 = vmatpush.msra.mxu0 0.0
      %646 = vmatpush.msra.mxu0 0.0
      %647 = vmatpush.msra.mxu0 0.0
      %648 = vmatpush.msra.mxu0 0.0
      %649 = vmatpush.msra.mxu0 0.0
      %650 = vmatpush.msra.mxu0 0.0
      %651 = vmatpush.msra.mxu0 0.0
      %652 = vmatpush.msra.mxu0 0.0
      %653 = vmatpush.msra.mxu0 0.0
      %654 = vmatpush.msra.mxu0 0.0
      %655 = vmatpush.msra.mxu0 0.0
      %656 = vmatpush.msra.mxu0 0.0
      %657 = vmatpush.msra.mxu0 0.0
      %658 = vmatpush.msra.mxu0 %v643
      %659 = vmatpush.msra.mxu0 %v609
      %660 = vmatpush.msra.mxu0 %v608
      %661 = vmatmul.f32.gmra.mxu0 %v640
      %v662 = vpop.f32.mrf.mxu0
      %v663 = vadd.f32 %v637, %v662
      %664 = vdwg.mxu0
      %v665 = vperm.slane %v615, 0
      %v666 = vadd.f32 %v663, %v665
      %vm667 = vcmp.gt.f32.partialorder %v666, 20.0
      %v668 = vmin.f32 %v666, 20.0
      %v669 = vmul.f32 %v668, 1.442695
      %v670 = vpow.pop %v669
      %v671 = vadd.f32 %v670, 1.0
      %v672 = vlog2.pop %v671
      %v673 = vmul.f32 %v672, 0.6931472
      %v674 = vmul.f32 -0.5, %v670
      %v675 = vadd.f32 %v674, 1.0
      %v676 = vmul.f32 %v675, %v670
      %v677 = vand.u32 2147483647, %v670
      %vm678 = vcmp.lt.f32.partialorder %v677, 0.0004427343
      %v679 = vsel %vm678, %v676, %v673
      %v680 = vsel %vm667, %v666, %v679
      %vm681 = vcmask 23552
      %682 = vst.msk [vmem:[%s307] sm:$0xff] %vm681, %v680
      %p683 = scmp.lt.s32.totalorder %s18, 3
      %s684 = scalar_select %p683, %s18, 3
      %s685 = smul.addr %s684, 8
      %s686 = scalar_lea.vmem %s7, %s685
      // Predicated region
      $region49: #{gnn_actor_forward_batched.1} parent=47 // pred_check
        %p687 = pneg %p198
      $region50: #{gnn_actor_forward_batched.1} parent=47 // pred_check_branch
        %689 = sbr.rel (%p687) target = $region52
      $region51: #{gnn_actor_forward_batched.1} parent=47 // pred_region
        _
      $region52: #{gnn_actor_forward_batched.1} parent=47 // pred_fallthru
        _
    $region48: #{gnn_actor_forward_batched.1} parent=5 // pred_fallthru
      _
    %p690 = scmp.le.s32.totalorder 2, %s13
    // Predicated region
    $region53: #{gnn_actor_forward_batched.1} parent=5 // pred_check
      %p691 = pneg %p690
    $region54: #{gnn_actor_forward_batched.1} parent=5 // pred_check_branch
      %693 = sbr.rel (%p691) target = $region56
    $region55: #{gnn_actor_forward_batched.1} parent=5 // pred_region
      %s694 = ssub.s32 %s13, 2
      // Predicated region
      $region57: #{gnn_actor_forward_batched.1} parent=55 // pred_check
        %p695 = pneg %p204
      $region58: #{gnn_actor_forward_batched.1} parent=55 // pred_check_branch
        %697 = sbr.rel (%p695) target = $region60
      $region59: #{gnn_actor_forward_batched.1} parent=55 // pred_region
        %p698 = scmp.lt.s32.totalorder %s19, 3
        %s699 = scalar_select %p698, %s19, 3
        %s700 = smul.addr %s699, 8
        %s701 = scalar_lea.vmem %s7, %s700
      $region60: #{gnn_actor_forward_batched.1} parent=55 // pred_fallthru
        _
    $region56: #{gnn_actor_forward_batched.1} parent=5 // pred_fallthru
      _
  $region6: #{gnn_actor_forward_batched.1} parent=0 // loop_footer
    %s17 = sadd.s32 1, %s13
  $region7: #{gnn_actor_forward_batched.1} parent=0 // loop_footer_branch
    %12 = sbr.rel target = $region3
  $region8: #{gnn_actor_forward_batched.1} parent=0 // loop_exit
    _

</llo_original>
